<compile_context>
chip_gen: v7x
topology: tpu7x:2x2x1
jax: 0.10.0
libtpu: 0.0.40
codegen_flags: <defaults>
</compile_context>

<pallas_src>
import jax
import jax.numpy as jnp
from jax.experimental import pallas as pl
from jax.experimental.pallas import tpu as pltpu

EPS = 1e-6


def _layer_norm_f32(x_ref, g_ref, b_ref):
    """torch-style LN (unbiased std, eps added to std), f32 math. -> (TM, H)."""
    n = x_ref.shape[-1]
    x = x_ref[...].astype(jnp.float32)
    mean = jnp.mean(x, axis=-1, keepdims=True)
    diff = x - mean
    var = jnp.sum(diff * diff, axis=-1, keepdims=True) * (1.0 / (n - 1))
    inv = pl.reciprocal(jnp.sqrt(var) + EPS, approx=True)   # EUP slot, ~free
    return diff * (g_ref[...] * inv) + b_ref[...]            # gamma folded into inv


def _fused_kernel_resident(x_ref, g_ref, b_ref, w_ref, bias_ref, o_ref):
    """Single-column-block variant: full HxH W resident in VMEM."""
    xn = _layer_norm_f32(x_ref, g_ref, b_ref)
    # Feed the MXU in W's native dtype (bf16 path runs ~4x the f32 rate).
    y = jnp.dot(xn.astype(w_ref.dtype), w_ref[...],
                preferred_element_type=jnp.float32)
    y = y + bias_ref[...]
    # TODO(synk): training-mode dropout (pltpu.prng_*) omitted; eval identity.
    # Residual: re-read the already-VMEM-resident x tile (shorter live range).
    o_ref[...] = (x_ref[...].astype(jnp.float32) + y).astype(o_ref.dtype)


def _fused_kernel_coltiled(x_ref, xres_ref, g_ref, b_ref, w_ref, bias_ref,
                           o_ref, xn_ref):
    """Column-tiled variant (large H / v7x): W streamed as (H, TN) tiles."""
    @pl.when(pl.program_id(1) == 0)
    def _():
        # LN computed once per row tile, reused for every output-column block.
        xn_ref[...] = _layer_norm_f32(x_ref, g_ref, b_ref).astype(xn_ref.dtype)

    y = jnp.dot(xn_ref[...], w_ref[...], preferred_element_type=jnp.float32)
    y = y + bias_ref[...]
    # TODO(synk): training-mode dropout (pltpu.prng_*) omitted; eval identity.
    o_ref[...] = (xres_ref[...].astype(jnp.float32) + y).astype(o_ref.dtype)


def sublayer_connection(x, gamma, beta, w, b, *, block_rows=512, block_cols=None):
    """x: [B, S, H] -> x + Linear(LayerNorm(x))  (dropout in eval mode)."""
    B, S, H = x.shape
    R = B * S
    x2d = x.reshape(R, H)

    x_bytes = jnp.dtype(x.dtype).itemsize
    w_bytes = jnp.dtype(w.dtype).itemsize

    # --- row tile: dtype-packing aligned; ensure >= 2 row steps when possible ---
    row_align = {4: 8, 2: 16, 1: 32}.get(x_bytes, 8)
    tm = min(block_rows, R)
    if R >= 2 * row_align:                       # keep both TCs busy (v7x/megacore)
        tm = min(tm, (R // 2 // row_align) * row_align)
    tm = max(row_align, (tm // row_align) * row_align)
    tm = min(tm, R)

    # --- column tile: keep the W tile <= ~8 MiB so everything fits v7x VMEM ---
    if block_cols is not None:
        tn = min(block_cols, H)
    elif H * H * w_bytes <= (8 << 20) or H % 128 != 0:
        tn = H                                   # W fully resident (v5e/v6e common case)
    else:
        tn = H
        for cand in (2048, 1024, 512, 256, 128):
            if H % cand == 0 and H * cand * w_bytes <= (8 << 20):
                tn = cand
                break

    n_row = pl.cdiv(R, tm)
    n_col = pl.cdiv(H, tn)
    single_col = (n_col == 1)

    # Grid-invariant small operands: cast ONCE here, never inside the kernel.
    g32 = gamma.astype(jnp.float32).reshape(1, H)
    be32 = beta.astype(jnp.float32).reshape(1, H)
    bias32 = b.astype(jnp.float32).reshape(1, H)

    if single_col:
        kernel = _fused_kernel_resident
        grid = (n_row,)
        in_specs = [
            pl.BlockSpec((tm, H), lambda i: (i, 0)),   # x row tile (pipelined)
            pl.BlockSpec((1, H), lambda i: (0, 0)),    # gamma (VMEM resident)
            pl.BlockSpec((1, H), lambda i: (0, 0)),    # beta
            pl.BlockSpec((H, H), lambda i: (0, 0)),    # W (resident, native dtype)
            pl.BlockSpec((1, H), lambda i: (0, 0)),    # bias
        ]
        out_specs = pl.BlockSpec((tm, H), lambda i: (i, 0))
        operands = (x2d, g32, be32, w, bias32)
        scratch_shapes = []
        dim_sem = ("parallel",)
    else:
        kernel = _fused_kernel_coltiled
        grid = (n_row, n_col)
        in_specs = [
            pl.BlockSpec((tm, H), lambda i, j: (i, 0)),    # x full row (LN input)
            pl.BlockSpec((tm, tn), lambda i, j: (i, j)),   # x residual slab
            pl.BlockSpec((1, H), lambda i, j: (0, 0)),     # gamma
            pl.BlockSpec((1, H), lambda i, j: (0, 0)),     # beta
            pl.BlockSpec((H, tn), lambda i, j: (0, j)),    # W column tile
            pl.BlockSpec((1, tn), lambda i, j: (0, j)),    # bias column tile
        ]
        out_specs = pl.BlockSpec((tm, tn), lambda i, j: (i, j))
        operands = (x2d, x2d, g32, be32, w, bias32)
        scratch_shapes = [pltpu.VMEM((tm, H), w.dtype)]    # LN result, reused per j
        dim_sem = ("parallel", "arbitrary")

    # Explicit VMEM budget: double-buffered tiles + resident params + scratch,
    # with headroom; clamped to stay inside v7x's 64 MiB physical VMEM.
    est = (2 * tm * H * x_bytes          # x tile
           + 4 * tm * tn * x_bytes       # out tile + residual slab
           + 2 * H * tn * w_bytes        # W tile
           + tm * H * w_bytes            # LN scratch
           + 8 * H * 4)                  # gamma / beta / bias
    vmem_limit = int(min(max(2 * est, 32 << 20), 48 << 20))

    cost = pl.CostEstimate(
        flops=2 * R * H * H + 8 * R * H,
        transcendentals=0,
        bytes_accessed=int((2 * R * H + (0 if single_col else R * H)) * x_bytes
                           + n_row * H * H * w_bytes + 3 * H * 4),
    )

    out = pl.pallas_call(
        kernel,
        out_shape=jax.ShapeDtypeStruct((R, H), x.dtype),
        grid=grid,
        in_specs=in_specs,
        out_specs=out_specs,
        scratch_shapes=scratch_shapes,
        compiler_params=pltpu.CompilerParams(
            dimension_semantics=dim_sem,
            vmem_limit_bytes=vmem_limit,
        ),
        cost_estimate=cost,
    )(*operands)

    return out.reshape(B, S, H)


def _reference(x, gamma, beta, w, b):
    xf = x.astype(jnp.float32)
    mean = jnp.mean(xf, axis=-1, keepdims=True)
    diff = xf - mean
    var = jnp.sum(diff * diff, axis=-1, keepdims=True) / (x.shape[-1] - 1)
    std = jnp.sqrt(var)
    xn = gamma * diff / (std + EPS) + beta
    return (xf + (xn @ w.astype(jnp.float32) + b)).astype(x.dtype)


if __name__ == "__main__":
    # Tolerances account for pl.reciprocal(approx=True) in the LN scale.
    ATOL = RTOL = 5e-3

    # --- test 1: module-default LN params, small shape, resident-W path ---
    B, S, H = 2, 8, 32
    key = jax.random.PRNGKey(0)
    kx, kw, kb = jax.random.split(key, 3)
    x = jax.random.normal(kx, (B, S, H), dtype=jnp.float32)
    gamma = jnp.ones((H,), dtype=jnp.float32)       # a_2 init
    beta = jnp.zeros((H,), dtype=jnp.float32)       # b_2 init
    w = jax.random.normal(kw, (H, H), dtype=jnp.float32) * 0.02
    b = jax.random.normal(kb, (H,), dtype=jnp.float32) * 0.02

    out = jax.block_until_ready(sublayer_connection(x, gamma, beta, w, b))
    ref = _reference(x, gamma, beta, w, b)
    assert out.shape == (B, S, H)
    assert jnp.allclose(out, ref, atol=ATOL, rtol=RTOL), \
        float(jnp.max(jnp.abs(out - ref)))

    # --- test 2: exercise the column-tiled (large-H / v7x) path ---
    B2, S2, H2 = 2, 8, 256
    k1, k2, k3, k4, k5 = jax.random.split(jax.random.PRNGKey(1), 5)
    x2 = jax.random.normal(k1, (B2, S2, H2), dtype=jnp.float32)
    g2 = 1.0 + 0.1 * jax.random.normal(k2, (H2,), dtype=jnp.float32)
    be2 = 0.1 * jax.random.normal(k3, (H2,), dtype=jnp.float32)
    w2 = jax.random.normal(k4, (H2, H2), dtype=jnp.float32) * 0.02
    bb2 = jax.random.normal(k5, (H2,), dtype=jnp.float32) * 0.02

    out2 = jax.block_until_ready(
        sublayer_connection(x2, g2, be2, w2, bb2, block_cols=128))
    ref2 = _reference(x2, g2, be2, w2, bb2)
    assert out2.shape == (B2, S2, H2)
    assert jnp.allclose(out2, ref2, atol=ATOL, rtol=RTOL), \
        float(jnp.max(jnp.abs(out2 - ref2)))

    print("KERNEL_OK")
</pallas_src>

<mosaic_0001>
module attributes {stable_mosaic.version = 11 : i64} {
  func.func @_fused_kernel_resident(%arg0: i32, %arg1: memref<8x32xf32, #tpu.memory_space<vmem>>, %arg2: memref<1x32xf32, #tpu.memory_space<vmem>>, %arg3: memref<1x32xf32, #tpu.memory_space<vmem>>, %arg4: memref<32x32xf32, #tpu.memory_space<vmem>>, %arg5: memref<1x32xf32, #tpu.memory_space<vmem>>, %arg6: memref<8x32xf32, #tpu.memory_space<vmem>>) attributes {dimension_semantics = [#tpu.dimension_semantics<parallel>], iteration_bounds = array<i64: 2>, scalar_prefetch = 0 : i64, scratch_operands = 0 : i64, tpu.core_type = #tpu.core_type<tc>, window_params = [{transform_indices = @transform_0, window_bounds = array<i64: 8, 32>}, {pipeline_mode = #tpu.pipeline_mode<synchronous>, transform_indices = @transform_1, window_bounds = array<i64: 1, 32>}, {pipeline_mode = #tpu.pipeline_mode<synchronous>, transform_indices = @transform_2, window_bounds = array<i64: 1, 32>}, {pipeline_mode = #tpu.pipeline_mode<synchronous>, transform_indices = @transform_3, window_bounds = array<i64: 32, 32>}, {pipeline_mode = #tpu.pipeline_mode<synchronous>, transform_indices = @transform_4, window_bounds = array<i64: 1, 32>}, {transform_indices = @transform_5, window_bounds = array<i64: 8, 32>}]} {
    %c0 = arith.constant 0 : index
    %c0_0 = arith.constant 0 : index
    %0 = vector.load %arg1[%c0, %c0_0] : memref<8x32xf32, #tpu.memory_space<vmem>>, vector<8x32xf32>
    %cst = arith.constant dense<0.000000e+00> : vector<8xf32>
    %1 = vector.multi_reduction <add>, %0, %cst [1] : vector<8x32xf32> to vector<8xf32>
    %2 = vector.shape_cast %1 : vector<8xf32> to vector<8x1xf32>
    %cst_1 = arith.constant 3.200000e+01 : f32
    %3 = vector.broadcast %cst_1 : f32 to vector<8x1xf32>
    %4 = arith.divf %2, %3 : vector<8x1xf32>
    %5 = vector.broadcast %4 : vector<8x1xf32> to vector<8x32xf32>
    %6 = arith.subf %0, %5 : vector<8x32xf32>
    %7 = arith.mulf %6, %6 : vector<8x32xf32>
    %cst_2 = arith.constant dense<0.000000e+00> : vector<8xf32>
    %8 = vector.multi_reduction <add>, %7, %cst_2 [1] : vector<8x32xf32> to vector<8xf32>
    %9 = vector.shape_cast %8 : vector<8xf32> to vector<8x1xf32>
    %cst_3 = arith.constant 0.0322580636 : f32
    %10 = vector.broadcast %cst_3 : f32 to vector<8x1xf32>
    %11 = arith.mulf %9, %10 : vector<8x1xf32>
    %12 = math.sqrt %11 : vector<8x1xf32>
    %cst_4 = arith.constant 9.99999997E-7 : f32
    %13 = vector.broadcast %cst_4 : f32 to vector<8x1xf32>
    %14 = arith.addf %12, %13 : vector<8x1xf32>
    %15 = tpu.reciprocal %14 {approx = true} : vector<8x1xf32> -> vector<8x1xf32>
    %c0_5 = arith.constant 0 : index
    %c0_6 = arith.constant 0 : index
    %16 = vector.load %arg2[%c0_5, %c0_6] : memref<1x32xf32, #tpu.memory_space<vmem>>, vector<1x32xf32>
    %17 = vector.broadcast %16 : vector<1x32xf32> to vector<8x32xf32>
    %18 = vector.broadcast %15 : vector<8x1xf32> to vector<8x32xf32>
    %19 = arith.mulf %17, %18 : vector<8x32xf32>
    %20 = arith.mulf %6, %19 : vector<8x32xf32>
    %c0_7 = arith.constant 0 : index
    %c0_8 = arith.constant 0 : index
    %21 = vector.load %arg3[%c0_7, %c0_8] : memref<1x32xf32, #tpu.memory_space<vmem>>, vector<1x32xf32>
    %22 = vector.broadcast %21 : vector<1x32xf32> to vector<8x32xf32>
    %23 = arith.addf %20, %22 : vector<8x32xf32>
    %c0_9 = arith.constant 0 : index
    %c0_10 = arith.constant 0 : index
    %24 = vector.load %arg4[%c0_9, %c0_10] : memref<32x32xf32, #tpu.memory_space<vmem>>, vector<32x32xf32>
    %cst_11 = arith.constant dense<0.000000e+00> : vector<8x32xf32>
    %25 = tpu.matmul %23, %24, %cst_11 {dimension_numbers = #tpu.dot_dimension_numbers<[1], [0], [0], [1], [0, 0, 1, 1], [], []>} : vector<8x32xf32>, vector<32x32xf32>, vector<8x32xf32> -> vector<8x32xf32>
    %c0_12 = arith.constant 0 : index
    %c0_13 = arith.constant 0 : index
    %26 = vector.load %arg5[%c0_12, %c0_13] : memref<1x32xf32, #tpu.memory_space<vmem>>, vector<1x32xf32>
    %27 = vector.broadcast %26 : vector<1x32xf32> to vector<8x32xf32>
    %28 = arith.addf %25, %27 : vector<8x32xf32>
    %c0_14 = arith.constant 0 : index
    %c0_15 = arith.constant 0 : index
    %29 = vector.load %arg1[%c0_14, %c0_15] : memref<8x32xf32, #tpu.memory_space<vmem>>, vector<8x32xf32>
    %30 = arith.addf %29, %28 : vector<8x32xf32>
    %c0_16 = arith.constant 0 : index
    %c0_17 = arith.constant 0 : index
    %31 = vector.load %arg6[%c0_16, %c0_17] : memref<8x32xf32, #tpu.memory_space<vmem>>, vector<8x32xf32>
    tpu.vector_store %arg6[%c0_16, %c0_17], %30 {strides = array<i32>} : memref<8x32xf32, #tpu.memory_space<vmem>>, vector<8x32xf32>,
    return
  }
  func.func @transform_0(%arg0: i32) -> (i32, i32) {
    %c0_i32 = arith.constant 0 : i32
    %c0_i32_0 = arith.constant 0 : i32
    return %arg0, %c0_i32 : i32, i32
  }
  func.func @transform_1(%arg0: i32) -> (i32, i32) {
    %c0_i32 = arith.constant 0 : i32
    %c0_i32_0 = arith.constant 0 : i32
    %c0_i32_1 = arith.constant 0 : i32
    return %c0_i32, %c0_i32_0 : i32, i32
  }
  func.func @transform_2(%arg0: i32) -> (i32, i32) {
    %c0_i32 = arith.constant 0 : i32
    %c0_i32_0 = arith.constant 0 : i32
    %c0_i32_1 = arith.constant 0 : i32
    return %c0_i32, %c0_i32_0 : i32, i32
  }
  func.func @transform_3(%arg0: i32) -> (i32, i32) {
    %c0_i32 = arith.constant 0 : i32
    %c0_i32_0 = arith.constant 0 : i32
    %c0_i32_1 = arith.constant 0 : i32
    return %c0_i32, %c0_i32_0 : i32, i32
  }
  func.func @transform_4(%arg0: i32) -> (i32, i32) {
    %c0_i32 = arith.constant 0 : i32
    %c0_i32_0 = arith.constant 0 : i32
    %c0_i32_1 = arith.constant 0 : i32
    return %c0_i32, %c0_i32_0 : i32, i32
  }
  func.func @transform_5(%arg0: i32) -> (i32, i32) {
    %c0_i32 = arith.constant 0 : i32
    %c0_i32_0 = arith.constant 0 : i32
    return %arg0, %c0_i32 : i32, i32
  }
}

</mosaic_0001>

<llo_original>
// kernel: tpu_custom_call.1
$region0: #{tpu_custom_call.1}
  #allocation0 [shape = 'u32[]', space=smem, size = 0x4, offset = 0x4, fixed_abs, tag = 'smem constant byte address 0x4 - core index']
  #allocation1 [shape = 'u32[144,128]{1,0:T(1,128)}', space=vmem, size = 0x12000, scoped, tag = 'internal scratch']
  %s0 = inlined_call_operand.hbm [shape: f32[16,32], index: 0, kind: input, shape index: {}]
  %s1 = inlined_call_operand.vmem [shape: f32[1,32], index: 1, kind: input, shape index: {}]
  %s2 = inlined_call_operand.vmem [shape: f32[1,32], index: 2, kind: input, shape index: {}]
  %s3 = inlined_call_operand.hbm [shape: f32[32,32], index: 3, kind: input, shape index: {}]
  %s4 = inlined_call_operand.vmem [shape: f32[1,32], index: 4, kind: input, shape index: {}]
  %s5 = inlined_call_operand.hbm [shape: f32[16,32], index: 5, kind: output, shape index: {}]
  %s6 = sld [smem:[#allocation0]]
  $region61: #{tpu_custom_call.1} parent=0
    _
  %s8 = ssub.s32 1, %s6
  %s9 = scalar_select 0, %s8, %s6
  $region1: #{tpu_custom_call.1} parent=0
    #allocation2 [shape = 'u8[8192]{0}', space=vmem, size = 0x2000, scoped, tag = 'input window, operand 0']
    #allocation3 [shape = 's32[2]{0}', space=sflag, size = 0x8, scoped, tag = 'scoped memory for tpu_custom_call.1']
    #allocation4 [shape = 's32[2]{0}', space=sflag, size = 0x8, scoped, tag = 'scoped memory for tpu_custom_call.1']
    #allocation5 [shape = 'u8[16384]{0}', space=vmem, size = 0x4000, scoped, tag = 'input window, operand 3, single buffered']
    #allocation6 [shape = 's32[1]{0}', space=sflag, size = 0x4, scoped, tag = 'scoped memory for tpu_custom_call.1']
    #allocation7 [shape = 'u8[8192]{0}', space=vmem, size = 0x2000, scoped, tag = 'output window, operand 0']
    %10 = vsyncpa [#allocation3], 0
    %s11 = scalar_lea.sflag [#allocation3], 1
    %12 = vsyncpa %s11, 0
    %13 = vsyncpa [#allocation6], 0
    %14 = vsyncpa [#allocation4], 0
    %s15 = scalar_lea.sflag [#allocation4], 1
    %16 = vsyncpa %s15, 0
    loop: start=0, step=1, limit=4
    $region2: #{tpu_custom_call.1} parent=1 // loop_pre_header
      _
    $region3: #{tpu_custom_call.1} parent=1 // loop_header
      %s18 = sphi 0, %s22
      %p19 = scmp.ge.s32.totalorder %s18, 4
      %s28 = sphi 0, %s30
      %s31 = sphi 0, %s28
      %s32 = sphi 0, %s31
      %s48 = sphi 0, %s32
      %s52 = sphi 0, %s52
      %s54 = sphi 0, %s52
      %s55 = sphi 0, %s54
      %s69 = sphi 0, %s55
      %s73 = sphi 0, %s73
      %s75 = sphi 0, %s73
      %s76 = sphi 0, %s75
      %s90 = sphi 0, %s76
      %s94 = sphi 0, %s94
      %s96 = sphi 0, %s94
      %s97 = sphi 0, %s96
      %s111 = sphi 0, %s97
      %s115 = sphi 0, %s115
      %s117 = sphi 0, %s115
      %s118 = sphi 0, %s117
      %s132 = sphi 0, %s118
      %s138 = sphi 0, %s140
      %s141 = sphi 0, %s138
      %s142 = sphi 0, %s141
      %s158 = sphi 0, %s142
    $region4: #{tpu_custom_call.1} parent=1 // loop_header_branch
      %21 = sbr.rel (%p19) target = $region8
    $region5: #{tpu_custom_call.1} parent=1 // loop_body
      %s23 = ssub.s32 %s18, 1
      %s24 = ssub.s32 %s18, 2
      %s25 = sadd.s32 %s18, 1
      %s26 = ssub.s32 %s18, %s25
      %p27 = scmp.eq.s32.totalorder %s26, 0
      %s29 = sadd.s32 %s28, 1
      %s30 = scalar_select %p27, %s28, %s29
      %p33 = pneg %p27
      %p34 = scmp.eq.s32.totalorder %s18, 1
      %p35 = por %p33, %p34
      %p36 = scmp.ne.s32.totalorder %s28, %s31
      %p37 = scmp.eq.s32.totalorder %s18, 0
      %p38 = por %p36, %p37
      %p39 = scmp.ne.s32.totalorder %s28, %s31
      %p40 = scmp.eq.s32.totalorder %s23, 1
      %p41 = por %p39, %p40
      %p42 = scmp.ne.s32.totalorder %s31, %s32
      %p43 = scmp.eq.s32.totalorder %s23, 0
      %p44 = por %p42, %p43
      %p45 = scmp.ne.s32.totalorder %s31, %s32
      %p46 = scmp.eq.s32.totalorder %s24, 1
      %p47 = por %p45, %p46
      %p49 = scmp.ne.s32.totalorder %s32, %s48
      %p50 = scmp.eq.s32.totalorder %s24, 0
      %p51 = por %p49, %p50
      %s53 = sadd.s32 %s52, 1
      %p56 = scmp.eq.s32.totalorder %s18, 1
      %p57 = scmp.ne.s32.totalorder %s52, %s54
      %p58 = scmp.eq.s32.totalorder %s18, 0
      %p59 = por %p57, %p58
      %p60 = scmp.ne.s32.totalorder %s52, %s54
      %p61 = scmp.eq.s32.totalorder %s23, 1
      %p62 = por %p60, %p61
      %p63 = scmp.ne.s32.totalorder %s54, %s55
      %p64 = scmp.eq.s32.totalorder %s23, 0
      %p65 = por %p63, %p64
      %p66 = scmp.ne.s32.totalorder %s54, %s55
      %p67 = scmp.eq.s32.totalorder %s24, 1
      %p68 = por %p66, %p67
      %p70 = scmp.ne.s32.totalorder %s55, %s69
      %p71 = scmp.eq.s32.totalorder %s24, 0
      %p72 = por %p70, %p71
      %s74 = sadd.s32 %s73, 1
      %p77 = scmp.eq.s32.totalorder %s18, 1
      %p78 = scmp.ne.s32.totalorder %s73, %s75
      %p79 = scmp.eq.s32.totalorder %s18, 0
      %p80 = por %p78, %p79
      %p81 = scmp.ne.s32.totalorder %s73, %s75
      %p82 = scmp.eq.s32.totalorder %s23, 1
      %p83 = por %p81, %p82
      %p84 = scmp.ne.s32.totalorder %s75, %s76
      %p85 = scmp.eq.s32.totalorder %s23, 0
      %p86 = por %p84, %p85
      %p87 = scmp.ne.s32.totalorder %s75, %s76
      %p88 = scmp.eq.s32.totalorder %s24, 1
      %p89 = por %p87, %p88
      %p91 = scmp.ne.s32.totalorder %s76, %s90
      %p92 = scmp.eq.s32.totalorder %s24, 0
      %p93 = por %p91, %p92
      %s95 = sadd.s32 %s94, 1
      %p98 = scmp.eq.s32.totalorder %s18, 1
      %p99 = scmp.ne.s32.totalorder %s94, %s96
      %p100 = scmp.eq.s32.totalorder %s18, 0
      %p101 = por %p99, %p100
      %p102 = scmp.ne.s32.totalorder %s94, %s96
      %p103 = scmp.eq.s32.totalorder %s23, 1
      %p104 = por %p102, %p103
      %p105 = scmp.ne.s32.totalorder %s96, %s97
      %p106 = scmp.eq.s32.totalorder %s23, 0
      %p107 = por %p105, %p106
      %p108 = scmp.ne.s32.totalorder %s96, %s97
      %p109 = scmp.eq.s32.totalorder %s24, 1
      %p110 = por %p108, %p109
      %p112 = scmp.ne.s32.totalorder %s97, %s111
      %p113 = scmp.eq.s32.totalorder %s24, 0
      %p114 = por %p112, %p113
      %s116 = sadd.s32 %s115, 1
      %p119 = scmp.eq.s32.totalorder %s18, 1
      %p120 = scmp.ne.s32.totalorder %s115, %s117
      %p121 = scmp.eq.s32.totalorder %s18, 0
      %p122 = por %p120, %p121
      %p123 = scmp.ne.s32.totalorder %s115, %s117
      %p124 = scmp.eq.s32.totalorder %s23, 1
      %p125 = por %p123, %p124
      %p126 = scmp.ne.s32.totalorder %s117, %s118
      %p127 = scmp.eq.s32.totalorder %s23, 0
      %p128 = por %p126, %p127
      %p129 = scmp.ne.s32.totalorder %s117, %s118
      %p130 = scmp.eq.s32.totalorder %s24, 1
      %p131 = por %p129, %p130
      %p133 = scmp.ne.s32.totalorder %s118, %s132
      %p134 = scmp.eq.s32.totalorder %s24, 0
      %p135 = por %p133, %p134
      %s136 = ssub.s32 %s18, %s25
      %p137 = scmp.eq.s32.totalorder %s136, 0
      %s139 = sadd.s32 %s138, 1
      %s140 = scalar_select %p137, %s138, %s139
      %p143 = pneg %p137
      %p144 = scmp.eq.s32.totalorder %s18, 1
      %p145 = por %p143, %p144
      %p146 = scmp.ne.s32.totalorder %s138, %s141
      %p147 = scmp.eq.s32.totalorder %s18, 0
      %p148 = por %p146, %p147
      %p149 = scmp.ne.s32.totalorder %s138, %s141
      %p150 = scmp.eq.s32.totalorder %s23, 1
      %p151 = por %p149, %p150
      %p152 = scmp.ne.s32.totalorder %s141, %s142
      %p153 = scmp.eq.s32.totalorder %s23, 0
      %p154 = por %p152, %p153
      %p155 = scmp.ne.s32.totalorder %s141, %s142
      %p156 = scmp.eq.s32.totalorder %s24, 1
      %p157 = por %p155, %p156
      %p159 = scmp.ne.s32.totalorder %s142, %s158
      %p160 = scmp.eq.s32.totalorder %s24, 0
      %p161 = por %p159, %p160
      %p162 = scmp.le.s32.totalorder 1, %s18
      %p163 = scmp.lt.s32.totalorder %s18, 3
      %p164 = pnand %p162, %p163
      %p165 = pneg %p164
      // Predicated region
      $region9: #{tpu_custom_call.1} parent=5 // pred_check
        _
      $region10: #{tpu_custom_call.1} parent=5 // pred_check_branch
        %167 = sbr.rel (%p164) target = $region12
      $region11: #{tpu_custom_call.1} parent=5 // pred_region
        %s168 = ssub.s32 %s18, 1
        // Predicated region
        $region13: #{tpu_custom_call.1} parent=11 // pred_check
          %p169 = pneg %p65
        $region14: #{tpu_custom_call.1} parent=11 // pred_check_branch
          %171 = sbr.rel (%p169) target = $region16
        $region15: #{tpu_custom_call.1} parent=11 // pred_region
          _
        $region16: #{tpu_custom_call.1} parent=11 // pred_fallthru
          _
        // Predicated region
        $region17: #{tpu_custom_call.1} parent=11 // pred_check
          %p172 = pneg %p86
        $region18: #{tpu_custom_call.1} parent=11 // pred_check_branch
          %174 = sbr.rel (%p172) target = $region20
        $region19: #{tpu_custom_call.1} parent=11 // pred_region
          _
        $region20: #{tpu_custom_call.1} parent=11 // pred_fallthru
          _
        // Predicated region
        $region21: #{tpu_custom_call.1} parent=11 // pred_check
          %p175 = pneg %p107
        $region22: #{tpu_custom_call.1} parent=11 // pred_check_branch
          %177 = sbr.rel (%p175) target = $region24
        $region23: #{tpu_custom_call.1} parent=11 // pred_region
          %s179 = ssub.s32 512, 512
          %180 = vsyncadd [#allocation6], %s179
          %s181 = sshll.u32 [#allocation5], 4
          %s182 = int_to_ptr.vmem [resolvable:$true] %s181
          %187 = dma.hbm_to_vmem [thread:$0]  %s3, 512, %s182, [#allocation6], 128, 128, 8
        $region24: #{tpu_custom_call.1} parent=11 // pred_fallthru
          _
        // Predicated region
        $region25: #{tpu_custom_call.1} parent=11 // pred_check
          %p188 = pneg %p128
        $region26: #{tpu_custom_call.1} parent=11 // pred_check_branch
          %190 = sbr.rel (%p188) target = $region28
        $region27: #{tpu_custom_call.1} parent=11 // pred_region
          _
        $region28: #{tpu_custom_call.1} parent=11 // pred_fallthru
          _
      $region12: #{tpu_custom_call.1} parent=5 // pred_fallthru
        _
      %p191 = scmp.lt.s32.totalorder %s18, 2
      // Predicated region
      $region29: #{tpu_custom_call.1} parent=5 // pred_check
        %p192 = pneg %p191
      $region30: #{tpu_custom_call.1} parent=5 // pred_check_branch
        %194 = sbr.rel (%p192) target = $region32
      $region31: #{tpu_custom_call.1} parent=5 // pred_region
        // Predicated region
        $region33: #{tpu_custom_call.1} parent=31 // pred_check
          %p195 = pneg %p38
        $region34: #{tpu_custom_call.1} parent=31 // pred_check_branch
          %197 = sbr.rel (%p195) target = $region36
        $region35: #{tpu_custom_call.1} parent=31 // pred_region
          %s198 = sand.u32 %s28, 1
          %s199 = scalar_lea.sflag [#allocation3], %s198
          %s200 = sand.u32 %s28, 1
          %s201 = smul.addr %s200, 8
          %s202 = scalar_lea.vmem [#allocation2], %s201
          %s204 = ssub.s32 128, 128
          %205 = vsyncadd %s199, %s204
          %s206 = smul.addr %s18, 128
          %s207 = scalar_lea.hbm %s0, %s206
          %s209 = sshll.u32 %s202, 4
          %s210 = int_to_ptr.vmem [resolvable:$true] %s209
          %212 = dma.hbm_to_vmem [thread:$0]  %s207, 128, %s210, %s199
        $region36: #{tpu_custom_call.1} parent=31 // pred_fallthru
          _
      $region32: #{tpu_custom_call.1} parent=5 // pred_fallthru
        _
      %p213 = scmp.le.s32.totalorder 1, %s18
      %p214 = scmp.lt.s32.totalorder %s18, 3
      %p215 = pnand %p213, %p214
      %p216 = pneg %p215
      // Predicated region
      $region37: #{tpu_custom_call.1} parent=5 // pred_check
        _
      $region38: #{tpu_custom_call.1} parent=5 // pred_check_branch
        %218 = sbr.rel (%p215) target = $region40
      $region39: #{tpu_custom_call.1} parent=5 // pred_region
        %s219 = ssub.s32 %s18, 1
        %s220 = sand.u32 %s31, 1
        %s221 = scalar_lea.sflag [#allocation3], %s220
        %s222 = sand.u32 %s31, 1
        %s223 = smul.addr %s222, 8
        %s224 = scalar_lea.vmem [#allocation2], %s223
        // Predicated region
        $region41: #{tpu_custom_call.1} parent=39 // pred_check
          %p225 = pneg %p44
        $region42: #{tpu_custom_call.1} parent=39 // pred_check_branch
          %227 = sbr.rel (%p225) target = $region44
        $region43: #{tpu_custom_call.1} parent=39 // pred_region
          %228 = dma.done %s221, 128
        $region44: #{tpu_custom_call.1} parent=39 // pred_fallthru
          _
        // Predicated region
        $region45: #{tpu_custom_call.1} parent=39 // pred_check
          %p229 = pneg %p107
        $region46: #{tpu_custom_call.1} parent=39 // pred_check_branch
          %231 = sbr.rel (%p229) target = $region48
        $region47: #{tpu_custom_call.1} parent=39 // pred_region
          %232 = dma.done [#allocation6], 512
        $region48: #{tpu_custom_call.1} parent=39 // pred_fallthru
          _
        %s233 = sand.u32 %s31, 1
        %s234 = scalar_lea.sflag [#allocation3], %s233
        %s235 = sand.u32 %s31, 1
        %s236 = smul.addr %s235, 8
        %s237 = scalar_lea.vmem [#allocation2], %s236
        %p238 = pneg %p44
        %p239 = pneg %p41
        %p240 = pneg %p65
        %p241 = pneg %p62
        %p242 = pneg %p86
        %p243 = pneg %p83
        %p244 = pneg %p107
        %p245 = pneg %p104
        %p246 = pneg %p128
        %p247 = pneg %p125
        %p248 = pneg %p154
        %p249 = pneg %p151
        %s250 = sand.u32 %s141, 1
        %s251 = scalar_lea.sflag [#allocation4], %s250
        %s252 = sand.u32 %s141, 1
        %s253 = smul.addr %s252, 8
        %s254 = scalar_lea.vmem [#allocation7], %s253
        %v255 = vld [vmem:[%s224] sm:$0xff]
        %vm256 = vcmask 261120
        %v257 = vsel %vm256, %v255, 0.0
        %258 = vadd.xlane.f32.xlu0 %v257
        %v259 = vpop.xlane.xlu0 %258
        %v260 = vrcp.pop 32.0
        %v261 = vmul.f32 %v259, %v260
        %v262 = vsub.f32 %v255, %v261
        %v263 = vmul.f32 %v262, %v262
        %v264 = vsel %vm256, %v263, 0.0
        %265 = vadd.xlane.f32.xlu0 %v264
        %v266 = vpop.xlane.xlu0 %265
        %v267 = vmul.f32 %v266, 0.032258064
        %v268 = vrsqrt.pop %v267
        %v269 = vmul.f32 %v267, %v268
        %vm270 = vcmp.eq.f32.partialorder %v267, inf
        %v271 = vsel %vm270, %v267, %v269
        %vm272 = vcmp.eq.f32.partialorder %v267, 0.0
        %v273 = vand.u32 %v267, 2147483648
        %v274 = vsel %vm272, %v273, %v271
        %v275 = vadd.f32 %v274, 1e-06
        %v276 = vrcp.pop %v275
        %v277 = vld [vmem:[%s1] sm:$0x1]
        %v279 = vlaneseq
        %v280 = vshrl.u32 %v279, 7
        %v281 = vsub.s32 0, %v280
        %v282 = vrot.slane %v277, %v281
        %v284 = vmul.f32 %v282, %v276
        %v285 = vmul.f32 %v262, %v284
        %v286 = vld [vmem:[%s2] sm:$0x1]
        %v288 = vlaneseq
        %v289 = vshrl.u32 %v288, 7
        %v290 = vsub.s32 0, %v289
        %v291 = vrot.slane %v286, %v290
        %v293 = vadd.f32 %v285, %v291
        %v294 = vld [vmem:[#allocation5] sm:$0xff]
        %v295 = vld [vmem:[#allocation5 + $0x8] sm:$0xff]
        %v296 = vld [vmem:[#allocation5 + $0x10] sm:$0xff]
        %v297 = vld [vmem:[#allocation5 + $0x18] sm:$0xff]
        %v298 = vld [vmem:[%s4] sm:$0x1]
        %v300 = vlaneseq
        %v301 = vshrl.u32 %v300, 7
        %v302 = vsub.s32 0, %v301
        %v303 = vrot.slane %v298, %v302
        %v306 = vsel %vm256, %v293, 0
        %308 = vmatprep.subr.mxu0 0.0
        %309 = vmatpush1.msra.mxu0 %v294
        %310 = vmatprep.subr.mxu0 0.0
        %311 = vmatpush1.msra.mxu0 %v295
        %312 = vmatprep.subr.mxu0 0.0
        %313 = vmatpush1.msra.mxu0 %v296
        %314 = vmatprep.subr.mxu0 0.0
        %315 = vmatpush1.msra.mxu0 %v297
        %316 = vmatprep.subr.mxu0 0.0
        %317 = vmatpush1.msra.mxu0 0.0
        %318 = vmatprep.subr.mxu0 0.0
        %319 = vmatpush1.msra.mxu0 0.0
        %320 = vmatprep.subr.mxu0 0.0
        %321 = vmatpush1.msra.mxu0 0.0
        %322 = vmatprep.subr.mxu0 0.0
        %323 = vmatpush1.msra.mxu0 0.0
        %324 = vmatprep.subr.mxu0 0.0
        %325 = vmatpush1.msra.mxu0 0.0
        %326 = vmatprep.subr.mxu0 0.0
        %327 = vmatpush1.msra.mxu0 0.0
        %328 = vmatprep.subr.mxu0 0.0
        %329 = vmatpush1.msra.mxu0 0.0
        %330 = vmatprep.subr.mxu0 0.0
        %331 = vmatpush1.msra.mxu0 0.0
        %332 = vmatprep.subr.mxu0 0.0
        %333 = vmatpush1.msra.mxu0 0.0
        %334 = vmatprep.subr.mxu0 0.0
        %335 = vmatpush1.msra.mxu0 0.0
        %336 = vmatprep.subr.mxu0 0.0
        %337 = vmatpush1.msra.mxu0 0.0
        %338 = vmatprep.subr.mxu0 0.0
        %339 = vmatpush1.msra.mxu0 0.0
        %340 = vmatprep.subr.mxu0 0.0
        %341 = vmatpush1.msra.mxu0 0.0
        %342 = vmatprep.subr.mxu0 0.0
        %343 = vmatpush1.msra.mxu0 0.0
        %344 = vmatprep.subr.mxu0 0.0
        %345 = vmatpush1.msra.mxu0 0.0
        %346 = vmatprep.subr.mxu0 0.0
        %347 = vmatpush1.msra.mxu0 0.0
        %348 = vmatprep.subr.mxu0 0.0
        %349 = vmatpush1.msra.mxu0 0.0
        %350 = vmatprep.subr.mxu0 0.0
        %351 = vmatpush1.msra.mxu0 0.0
        %352 = vmatprep.subr.mxu0 0.0
        %353 = vmatpush1.msra.mxu0 0.0
        %354 = vmatprep.subr.mxu0 0.0
        %355 = vmatpush1.msra.mxu0 0.0
        %356 = vmatprep.subr.mxu0 0.0
        %357 = vmatpush1.msra.mxu0 0.0
        %358 = vmatprep.subr.mxu0 0.0
        %359 = vmatpush1.msra.mxu0 0.0
        %360 = vmatprep.subr.mxu0 0.0
        %361 = vmatpush1.msra.mxu0 0.0
        %362 = vmatprep.subr.mxu0 0.0
        %363 = vmatpush1.msra.mxu0 0.0
        %364 = vmatprep.subr.mxu0 0.0
        %365 = vmatpush1.msra.mxu0 0.0
        %366 = vmatprep.subr.mxu0 0.0
        %367 = vmatpush1.msra.mxu0 0.0
        %368 = vmatprep.subr.mxu0 0.0
        %369 = vmatpush1.msra.mxu0 0.0
        %370 = vmatprep.subr.mxu0 0.0
        %371 = vmatpush1.msra.mxu0 0.0
        %372 = vmatprep.mubr.f32.mxu0 0.0
        %373 = vmatmul.mubr.f32.gmra.mrb[0].mxu0 %v306
        %v374 = vpop.f32.mrb[0].mxu0
        %v375 = vadd.f32 %v303, %v374
        %v376 = vpop.f32.mrb[0].mxu0
        %377 = vdwg.mxu0
        %v378 = vadd.f32 %v255, %v375
        %379 = vst.msk [vmem:[%s254] sm:$0xff] %vm256, %v378
        %s380 = sand.u32 %s141, 1
        %s381 = scalar_lea.sflag [#allocation4], %s380
        %s382 = sand.u32 %s141, 1
        %s383 = smul.addr %s382, 8
        %s384 = scalar_lea.vmem [#allocation7], %s383
        // Predicated region
        $region49: #{tpu_custom_call.1} parent=39 // pred_check
          %p385 = pneg %p151
        $region50: #{tpu_custom_call.1} parent=39 // pred_check_branch
          %387 = sbr.rel (%p385) target = $region52
        $region51: #{tpu_custom_call.1} parent=39 // pred_region
          %s389 = ssub.s32 128, 128
          %390 = vsyncadd %s381, %s389
          %s391 = smul.addr %s23, 128
          %s392 = scalar_lea.hbm %s5, %s391
          %s394 = sshll.u32 %s384, 4
          %s395 = int_to_ptr.vmem [resolvable:$true] %s394
          %397 = dma.vmem_to_hbm [thread:$0]  %s395, 128, %s392, %s381
        $region52: #{tpu_custom_call.1} parent=39 // pred_fallthru
          _
      $region40: #{tpu_custom_call.1} parent=5 // pred_fallthru
        _
      %p398 = scmp.le.s32.totalorder 2, %s18
      // Predicated region
      $region53: #{tpu_custom_call.1} parent=5 // pred_check
        %p399 = pneg %p398
      $region54: #{tpu_custom_call.1} parent=5 // pred_check_branch
        %401 = sbr.rel (%p399) target = $region56
      $region55: #{tpu_custom_call.1} parent=5 // pred_region
        %s402 = ssub.s32 %s18, 2
        // Predicated region
        $region57: #{tpu_custom_call.1} parent=55 // pred_check
          %p403 = pneg %p157
        $region58: #{tpu_custom_call.1} parent=55 // pred_check_branch
          %405 = sbr.rel (%p403) target = $region60
        $region59: #{tpu_custom_call.1} parent=55 // pred_region
          %s406 = sand.u32 %s142, 1
          %s407 = scalar_lea.sflag [#allocation4], %s406
          %s408 = sand.u32 %s142, 1
          %s409 = smul.addr %s408, 8
          %s410 = scalar_lea.vmem [#allocation7], %s409
          %411 = dma.done %s407, 128
        $region60: #{tpu_custom_call.1} parent=55 // pred_fallthru
          _
      $region56: #{tpu_custom_call.1} parent=5 // pred_fallthru
        _
    $region6: #{tpu_custom_call.1} parent=1 // loop_footer
      %s22 = sadd.s32 1, %s18
    $region7: #{tpu_custom_call.1} parent=1 // loop_footer_branch
      %17 = sbr.rel target = $region3
    $region8: #{tpu_custom_call.1} parent=1 // loop_exit
      _
    %412 = vsyncpa [#allocation3], 1
    %s413 = scalar_lea.sflag [#allocation3], 1
    %414 = vsyncpa %s413, 1
    %415 = vsyncpa [#allocation6], 1
    %416 = vsyncpa [#allocation4], 1
    %s417 = scalar_lea.sflag [#allocation4], 1
    %418 = vsyncpa %s417, 1

</llo_original>
